<compile_context>
chip_gen: v7x
topology: tpu7x:2x2x1
jax: 0.10.0
libtpu: 0.0.40
codegen_flags: <defaults>
</compile_context>

<pallas_src>
import functools

import jax
import jax.numpy as jnp
from jax.experimental import pallas as pl
from jax.experimental.pallas import tpu as pltpu

NEG_SLOPE = 0.01  # nn.LeakyReLU() default negative_slope


def _disc_kernel(x_ref, w0_ref, b0_ref, w1_ref, o_ref, *, is_wasserstein: bool):
    # x_ref:  [tb, D]    w0_ref: [D, Hp]   b0_ref: [1, Hp]   w1_ref: [1, Hp]
    # o_ref:  [1, tb]    (lane-dense: batch along the 128-lane axis)
    x = x_ref[...]  # native dtype into the MXU; f32 accumulation below

    # layer_0: X @ W0^T + b0   (MXU, f32 accumulator; b0 already f32)
    h = jnp.dot(x, w0_ref[...], preferred_element_type=jnp.float32)
    h = h + b0_ref[...]

    # LeakyReLU(0.01): single vmax (slope < 1 => max(h, 0.01*h) == leaky_relu)
    h = jnp.maximum(h, NEG_SLOPE * h)

    # out_layer: single output column -> VPU multiply + lane reduction.
    # b1 is carried by a reserved padded lane (b0p=1, w1p=b1), so no scalar add.
    y = jnp.sum(h * w1_ref[...], axis=-1)  # [tb], f32

    if not is_wasserstein:
        y = jax.nn.sigmoid(y)  # EUP transcendental

    o_ref[...] = y.reshape(1, y.shape[0]).astype(o_ref.dtype)


def prepare_params(w0, b0, w1, b1, compute_dtype=None):
    """One-time (outside the hot path) prep of PyTorch-layout parameters.

    w0: [H, D], b0: [H], w1: [1, H], b1: [1]
    Pass compute_dtype matching x.dtype (e.g. bf16) for a single-pass MXU feed.
    Returns (w0p [D,Hp], b0p [1,Hp] f32, w1p [1,Hp] f32) with b1 folded into a
    reserved padded lane (index H).
    """
    H, D = w0.shape
    if compute_dtype is None:
        compute_dtype = w0.dtype
    # At least one spare lane (index H) carries the out_layer bias.
    Hp = int(pl.cdiv(H + 1, 128)) * 128

    w0p = jnp.zeros((D, Hp), compute_dtype).at[:, :H].set(
        jnp.transpose(w0).astype(compute_dtype))
    b0p = jnp.zeros((1, Hp), jnp.float32).at[:, :H].set(
        b0.reshape(1, H).astype(jnp.float32))
    b0p = b0p.at[0, H].set(1.0)  # h at lane H == LeakyReLU(0*x + 1) == 1
    w1p = jnp.zeros((1, Hp), jnp.float32).at[:, :H].set(
        w1.reshape(1, H).astype(jnp.float32))
    w1p = w1p.at[0, H].set(b1.reshape(()).astype(jnp.float32))  # 1 * b1 == b1
    # Remaining padded lanes: b0p=0, w0 col=0, w1p=0  ->  contribute exactly 0.
    return w0p, b0p, w1p


def _choose_tiling(B):
    """Return (tb, Bp): batch-tile rows and padded batch size (Bp % tb == 0)."""
    if B <= 1024:
        # Small batch: single tile (block == full array, fits VMEM trivially).
        return B, B
    # Large batch: biggest 128-aligned tile <= 4096 that still yields >= 4
    # grid steps (keeps pipelining + both v7x TensorCores busy); cap 4096 keeps
    # the double-buffered lane-padded x tile + h temp within v5e's 16 MiB
    # default scoped-VMEM limit.
    tb = 4096
    while tb > 256 and B < 4 * tb:
        tb //= 2
    steps = int(pl.cdiv(B, tb))
    if steps % 2:
        steps += 1  # even split across the two v7x TensorCores
    return tb, steps * tb


def discriminator_forward(x, params, *, is_wasserstein=False, tb=None):
    """x: [B, D]; params = prepare_params(w0, b0, w1, b1). Returns [B, 1]."""
    w0p, b0p, w1p = params
    B, D = x.shape
    Hp = w0p.shape[1]

    if tb is None:
        tb, Bp = _choose_tiling(B)
    else:
        Bp = int(pl.cdiv(B, tb)) * tb

    if Bp != B:
        # Zero rows are numerically inert for this kernel; their outputs are
        # sliced off below. Keeps a multi-step grid (no giant-tile VMEM blowup).
        x = jnp.zeros((Bp, D), x.dtype).at[:B, :].set(x)

    kernel = functools.partial(_disc_kernel, is_wasserstein=is_wasserstein)

    out = pl.pallas_call(
        kernel,
        out_shape=jax.ShapeDtypeStruct((1, Bp), x.dtype),
        grid_spec=pltpu.PrefetchScalarGridSpec(
            num_scalar_prefetch=0,
            grid=(Bp // tb,),
            in_specs=[
                pl.BlockSpec((tb, D), lambda i: (i, 0)),   # x batch tile
                pl.BlockSpec((D, Hp), lambda i: (0, 0)),   # W0^T (padded, resident)
                pl.BlockSpec((1, Hp), lambda i: (0, 0)),   # b0 (padded, +bias lane)
                pl.BlockSpec((1, Hp), lambda i: (0, 0)),   # w1 row (padded, +b1 lane)
            ],
            out_specs=pl.BlockSpec((1, tb), lambda i: (0, i)),  # lane-dense
        ),
        compiler_params=pltpu.CompilerParams(
            dimension_semantics=("parallel",)),
    )(x, w0p, b0p, w1p)

    return out[0, :B].reshape(B, 1)


def _reference(x, w0, b0, w1, b1, is_wasserstein=False):
    h = x @ jnp.transpose(w0) + b0
    h = jnp.where(h >= 0, h, NEG_SLOPE * h)
    y = jnp.sum(h * w1.reshape(1, -1), axis=-1, keepdims=True) + b1
    if not is_wasserstein:
        y = jax.nn.sigmoid(y)
    return y


if __name__ == "__main__":
    key = jax.random.PRNGKey(0)
    D, H = 32, 64  # data_shape, hidden_shape

    k_x, k_w0, k_b0, k_w1, k_b1, k_x2 = jax.random.split(key, 6)
    lim0 = 1.0 / jnp.sqrt(D)
    lim1 = 1.0 / jnp.sqrt(H)
    w0 = jax.random.uniform(k_w0, (H, D), minval=-lim0, maxval=lim0, dtype=jnp.float32)
    b0 = jax.random.uniform(k_b0, (H,),   minval=-lim0, maxval=lim0, dtype=jnp.float32)
    w1 = jax.random.uniform(k_w1, (1, H), minval=-lim1, maxval=lim1, dtype=jnp.float32)
    b1 = jax.random.uniform(k_b1, (1,),   minval=-lim1, maxval=lim1, dtype=jnp.float32)

    # One-time prep (outside hot path); weights match x dtype (f32 here).
    params = prepare_params(w0, b0, w1, b1, compute_dtype=jnp.float32)

    # Small case (single tile).
    B = 8
    x = jax.random.normal(k_x, (B, D), dtype=jnp.float32)
    out = jax.block_until_ready(discriminator_forward(x, params, is_wasserstein=False))
    ref = _reference(x, w0, b0, w1, b1, is_wasserstein=False)
    assert out.shape == (B, 1)
    assert jnp.allclose(out, ref, atol=2e-5, rtol=1e-4), "mismatch vs reference (B=8)"

    # Larger, non-tile-divisible case: exercises batch padding + multi-step
    # grid (even step count) + lane-dense tiling + output slice.
    B2 = 1300
    x2 = jax.random.normal(k_x2, (B2, D), dtype=jnp.float32)
    out2 = jax.block_until_ready(discriminator_forward(x2, params, is_wasserstein=False))
    ref2 = _reference(x2, w0, b0, w1, b1, is_wasserstein=False)
    assert out2.shape == (B2, 1)
    assert jnp.allclose(out2, ref2, atol=2e-5, rtol=1e-4), "mismatch vs reference (B=1300)"

    # Wasserstein branch (no sigmoid).
    outw = jax.block_until_ready(discriminator_forward(x, params, is_wasserstein=True))
    refw = _reference(x, w0, b0, w1, b1, is_wasserstein=True)
    assert jnp.allclose(outw, refw, atol=2e-5, rtol=1e-4), "mismatch vs reference (wass)"

    print("KERNEL_OK")
</pallas_src>

<mosaic_0001>
module attributes {stable_mosaic.version = 11 : i64} {
  func.func @_disc_kernel(%arg0: i32, %arg1: memref<8x32xf32, #tpu.memory_space<vmem>>, %arg2: memref<32x128xf32, #tpu.memory_space<vmem>>, %arg3: memref<1x128xf32, #tpu.memory_space<vmem>>, %arg4: memref<1x128xf32, #tpu.memory_space<vmem>>, %arg5: memref<1x8xf32, #tpu.memory_space<vmem>>) attributes {dimension_semantics = [#tpu.dimension_semantics<parallel>], iteration_bounds = array<i64: 1>, scalar_prefetch = 0 : i64, scratch_operands = 0 : i64, tpu.core_type = #tpu.core_type<tc>, window_params = [{transform_indices = @transform_0, window_bounds = array<i64: 8, 32>}, {pipeline_mode = #tpu.pipeline_mode<synchronous>, transform_indices = @transform_1, window_bounds = array<i64: 32, 128>}, {pipeline_mode = #tpu.pipeline_mode<synchronous>, transform_indices = @transform_2, window_bounds = array<i64: 1, 128>}, {pipeline_mode = #tpu.pipeline_mode<synchronous>, transform_indices = @transform_3, window_bounds = array<i64: 1, 128>}, {transform_indices = @transform_4, window_bounds = array<i64: 1, 8>}]} {
    %c0 = arith.constant 0 : index
    %c0_0 = arith.constant 0 : index
    %0 = vector.load %arg1[%c0, %c0_0] : memref<8x32xf32, #tpu.memory_space<vmem>>, vector<8x32xf32>
    %c0_1 = arith.constant 0 : index
    %c0_2 = arith.constant 0 : index
    %1 = vector.load %arg2[%c0_1, %c0_2] : memref<32x128xf32, #tpu.memory_space<vmem>>, vector<32x128xf32>
    %cst = arith.constant dense<0.000000e+00> : vector<8x128xf32>
    %2 = tpu.matmul %0, %1, %cst {dimension_numbers = #tpu.dot_dimension_numbers<[1], [0], [0], [1], [0, 0, 1, 1], [], []>} : vector<8x32xf32>, vector<32x128xf32>, vector<8x128xf32> -> vector<8x128xf32>
    %c0_3 = arith.constant 0 : index
    %c0_4 = arith.constant 0 : index
    %3 = vector.load %arg3[%c0_3, %c0_4] : memref<1x128xf32, #tpu.memory_space<vmem>>, vector<1x128xf32>
    %4 = vector.broadcast %3 : vector<1x128xf32> to vector<8x128xf32>
    %5 = arith.addf %2, %4 : vector<8x128xf32>
    %cst_5 = arith.constant 0.00999999977 : f32
    %6 = vector.broadcast %cst_5 : f32 to vector<8x128xf32>
    %7 = arith.mulf %6, %5 : vector<8x128xf32>
    %8 = arith.maximumf %5, %7 : vector<8x128xf32>
    %c0_6 = arith.constant 0 : index
    %c0_7 = arith.constant 0 : index
    %9 = vector.load %arg4[%c0_6, %c0_7] : memref<1x128xf32, #tpu.memory_space<vmem>>, vector<1x128xf32>
    %10 = vector.broadcast %9 : vector<1x128xf32> to vector<8x128xf32>
    %11 = arith.mulf %8, %10 : vector<8x128xf32>
    %cst_8 = arith.constant dense<0.000000e+00> : vector<8xf32>
    %12 = vector.multi_reduction <add>, %11, %cst_8 [1] : vector<8x128xf32> to vector<8xf32>
    %13 = arith.negf %12 : vector<8xf32>
    %14 = math.exp %13 : vector<8xf32>
    %cst_9 = arith.constant 1.000000e+00 : f32
    %15 = vector.broadcast %cst_9 : f32 to vector<8xf32>
    %16 = arith.addf %15, %14 : vector<8xf32>
    %17 = arith.divf %15, %16 : vector<8xf32>
    %18 = vector.shape_cast %17 : vector<8xf32> to vector<1x8xf32>
    %c0_10 = arith.constant 0 : index
    %c0_11 = arith.constant 0 : index
    %19 = vector.load %arg5[%c0_10, %c0_11] : memref<1x8xf32, #tpu.memory_space<vmem>>, vector<1x8xf32>
    tpu.vector_store %arg5[%c0_10, %c0_11], %18 {strides = array<i32>} : memref<1x8xf32, #tpu.memory_space<vmem>>, vector<1x8xf32>,
    return
  }
  func.func @transform_0(%arg0: i32) -> (i32, i32) {
    %c0_i32 = arith.constant 0 : i32
    %c0_i32_0 = arith.constant 0 : i32
    return %arg0, %c0_i32 : i32, i32
  }
  func.func @transform_1(%arg0: i32) -> (i32, i32) {
    %c0_i32 = arith.constant 0 : i32
    %c0_i32_0 = arith.constant 0 : i32
    %c0_i32_1 = arith.constant 0 : i32
    return %c0_i32, %c0_i32_0 : i32, i32
  }
  func.func @transform_2(%arg0: i32) -> (i32, i32) {
    %c0_i32 = arith.constant 0 : i32
    %c0_i32_0 = arith.constant 0 : i32
    %c0_i32_1 = arith.constant 0 : i32
    return %c0_i32, %c0_i32_0 : i32, i32
  }
  func.func @transform_3(%arg0: i32) -> (i32, i32) {
    %c0_i32 = arith.constant 0 : i32
    %c0_i32_0 = arith.constant 0 : i32
    %c0_i32_1 = arith.constant 0 : i32
    return %c0_i32, %c0_i32_0 : i32, i32
  }
  func.func @transform_4(%arg0: i32) -> (i32, i32) {
    %c0_i32 = arith.constant 0 : i32
    %c0_i32_0 = arith.constant 0 : i32
    return %c0_i32, %arg0 : i32, i32
  }
}

</mosaic_0001>

<llo_original>
// kernel: tpu_custom_call.1
$region0: #{tpu_custom_call.1}
  #allocation0 [shape = 'u32[]', space=smem, size = 0x4, offset = 0x4, fixed_abs, tag = 'smem constant byte address 0x4 - core index']
  #allocation1 [shape = 'u32[144,128]{1,0:T(1,128)}', space=vmem, size = 0x12000, scoped, tag = 'internal scratch']
  %s0 = inlined_call_operand.hbm [shape: f32[8,32], index: 0, kind: input, shape index: {}]
  %s1 = inlined_call_operand.hbm [shape: f32[32,128], index: 1, kind: input, shape index: {}]
  %s2 = inlined_call_operand.vmem [shape: f32[1,128], index: 2, kind: input, shape index: {}]
  %s3 = inlined_call_operand.vmem [shape: f32[1,128], index: 3, kind: input, shape index: {}]
  %s4 = inlined_call_operand.hbm [shape: f32[1,8], index: 4, kind: output, shape index: {}]
  %s5 = sld [smem:[#allocation0]]
  $region34: #{tpu_custom_call.1} parent=0
    _
  %s7 = ssub.s32 1, %s5
  %s8 = scalar_select 0, %s7, %s5
  $region1: #{tpu_custom_call.1} parent=0
    #allocation2 [shape = 'u8[4096]{0}', space=vmem, size = 0x1000, scoped, tag = 'input window, operand 0, single buffered']
    #allocation3 [shape = 's32[1]{0}', space=sflag, size = 0x4, scoped, tag = 'scoped memory for tpu_custom_call.1']
    #allocation4 [shape = 's32[1]{0}', space=sflag, size = 0x4, scoped, tag = 'scoped memory for tpu_custom_call.1']
    #allocation5 [shape = 'u8[16384]{0}', space=vmem, size = 0x4000, scoped, tag = 'input window, operand 1, single buffered']
    #allocation6 [shape = 's32[1]{0}', space=sflag, size = 0x4, scoped, tag = 'scoped memory for tpu_custom_call.1']
    #allocation7 [shape = 'u8[512]{0}', space=vmem, size = 0x400, scoped, tag = 'output window, operand 0, single buffered']
    %9 = vsyncpa [#allocation3], 0
    %10 = vsyncpa [#allocation6], 0
    %11 = vsyncpa [#allocation4], 0
    // Predicated region
    $region2: #{tpu_custom_call.1} parent=1 // pred_check
      _
    $region3: #{tpu_custom_call.1} parent=1 // pred_check_branch
      %13 = sbr.rel (0) target = $region5
    $region4: #{tpu_custom_call.1} parent=1 // pred_region
      %s15 = ssub.s32 128, 128
      %16 = vsyncadd [#allocation3], %s15
      %s18 = sshll.u32 [#allocation2], 4
      %s19 = int_to_ptr.vmem [resolvable:$true] %s18
      %21 = dma.hbm_to_vmem [thread:$0]  %s0, 128, %s19, [#allocation3]
    $region5: #{tpu_custom_call.1} parent=1 // pred_fallthru
      _
    // Predicated region
    $region6: #{tpu_custom_call.1} parent=1 // pred_check
      _
    $region7: #{tpu_custom_call.1} parent=1 // pred_check_branch
      %23 = sbr.rel (0) target = $region9
    $region8: #{tpu_custom_call.1} parent=1 // pred_region
      %s25 = ssub.s32 512, 512
      %26 = vsyncadd [#allocation6], %s25
      %s27 = sshll.u32 [#allocation5], 4
      %s28 = int_to_ptr.vmem [resolvable:$true] %s27
      %33 = dma.hbm_to_vmem [thread:$0]  %s1, 512, %s28, [#allocation6], 128, 128, 8
    $region9: #{tpu_custom_call.1} parent=1 // pred_fallthru
      _
    // Predicated region
    $region10: #{tpu_custom_call.1} parent=1 // pred_check
      _
    $region11: #{tpu_custom_call.1} parent=1 // pred_check_branch
      %35 = sbr.rel (0) target = $region13
    $region12: #{tpu_custom_call.1} parent=1 // pred_region
      _
    $region13: #{tpu_custom_call.1} parent=1 // pred_fallthru
      _
    // Predicated region
    $region14: #{tpu_custom_call.1} parent=1 // pred_check
      _
    $region15: #{tpu_custom_call.1} parent=1 // pred_check_branch
      %37 = sbr.rel (0) target = $region17
    $region16: #{tpu_custom_call.1} parent=1 // pred_region
      _
    $region17: #{tpu_custom_call.1} parent=1 // pred_fallthru
      _
    // Predicated region
    $region18: #{tpu_custom_call.1} parent=1 // pred_check
      _
    $region19: #{tpu_custom_call.1} parent=1 // pred_check_branch
      %39 = sbr.rel (0) target = $region21
    $region20: #{tpu_custom_call.1} parent=1 // pred_region
      %40 = dma.done [#allocation3], 128
    $region21: #{tpu_custom_call.1} parent=1 // pred_fallthru
      _
    // Predicated region
    $region22: #{tpu_custom_call.1} parent=1 // pred_check
      _
    $region23: #{tpu_custom_call.1} parent=1 // pred_check_branch
      %42 = sbr.rel (0) target = $region25
    $region24: #{tpu_custom_call.1} parent=1 // pred_region
      %43 = dma.done [#allocation6], 512
    $region25: #{tpu_custom_call.1} parent=1 // pred_fallthru
      _
    %v44 = vld [vmem:[#allocation2] sm:$0xff]
    %v45 = vld [vmem:[#allocation5] sm:$0xff]
    %v46 = vld [vmem:[#allocation5 + $0x8] sm:$0xff]
    %v47 = vld [vmem:[#allocation5 + $0x10] sm:$0xff]
    %v48 = vld [vmem:[#allocation5 + $0x18] sm:$0xff]
    %v49 = vld [vmem:[%s2] sm:$0x1]
    %v51 = vlaneseq
    %v52 = vshrl.u32 %v51, 7
    %v53 = vsub.s32 0, %v52
    %v54 = vrot.slane %v49, %v53
    %vm56 = vcmask 261120
    %v58 = vsel %vm56, %v44, 0
    %60 = vmatprep.subr.mxu0 0.0
    %61 = vmatpush1.msra.mxu0 %v45
    %62 = vmatprep.subr.mxu0 0.0
    %63 = vmatpush1.msra.mxu0 %v46
    %64 = vmatprep.subr.mxu0 0.0
    %65 = vmatpush1.msra.mxu0 %v47
    %66 = vmatprep.subr.mxu0 0.0
    %67 = vmatpush1.msra.mxu0 %v48
    %68 = vmatprep.subr.mxu0 0.0
    %69 = vmatpush1.msra.mxu0 0.0
    %70 = vmatprep.subr.mxu0 0.0
    %71 = vmatpush1.msra.mxu0 0.0
    %72 = vmatprep.subr.mxu0 0.0
    %73 = vmatpush1.msra.mxu0 0.0
    %74 = vmatprep.subr.mxu0 0.0
    %75 = vmatpush1.msra.mxu0 0.0
    %76 = vmatprep.subr.mxu0 0.0
    %77 = vmatpush1.msra.mxu0 0.0
    %78 = vmatprep.subr.mxu0 0.0
    %79 = vmatpush1.msra.mxu0 0.0
    %80 = vmatprep.subr.mxu0 0.0
    %81 = vmatpush1.msra.mxu0 0.0
    %82 = vmatprep.subr.mxu0 0.0
    %83 = vmatpush1.msra.mxu0 0.0
    %84 = vmatprep.subr.mxu0 0.0
    %85 = vmatpush1.msra.mxu0 0.0
    %86 = vmatprep.subr.mxu0 0.0
    %87 = vmatpush1.msra.mxu0 0.0
    %88 = vmatprep.subr.mxu0 0.0
    %89 = vmatpush1.msra.mxu0 0.0
    %90 = vmatprep.subr.mxu0 0.0
    %91 = vmatpush1.msra.mxu0 0.0
    %92 = vmatprep.subr.mxu0 0.0
    %93 = vmatpush1.msra.mxu0 0.0
    %94 = vmatprep.subr.mxu0 0.0
    %95 = vmatpush1.msra.mxu0 0.0
    %96 = vmatprep.subr.mxu0 0.0
    %97 = vmatpush1.msra.mxu0 0.0
    %98 = vmatprep.subr.mxu0 0.0
    %99 = vmatpush1.msra.mxu0 0.0
    %100 = vmatprep.subr.mxu0 0.0
    %101 = vmatpush1.msra.mxu0 0.0
    %102 = vmatprep.subr.mxu0 0.0
    %103 = vmatpush1.msra.mxu0 0.0
    %104 = vmatprep.subr.mxu0 0.0
    %105 = vmatpush1.msra.mxu0 0.0
    %106 = vmatprep.subr.mxu0 0.0
    %107 = vmatpush1.msra.mxu0 0.0
    %108 = vmatprep.subr.mxu0 0.0
    %109 = vmatpush1.msra.mxu0 0.0
    %110 = vmatprep.subr.mxu0 0.0
    %111 = vmatpush1.msra.mxu0 0.0
    %112 = vmatprep.subr.mxu0 0.0
    %113 = vmatpush1.msra.mxu0 0.0
    %114 = vmatprep.subr.mxu0 0.0
    %115 = vmatpush1.msra.mxu0 0.0
    %116 = vmatprep.subr.mxu0 0.0
    %117 = vmatpush1.msra.mxu0 0.0
    %118 = vmatprep.subr.mxu0 0.0
    %119 = vmatpush1.msra.mxu0 0.0
    %120 = vmatprep.subr.mxu0 0.0
    %121 = vmatpush1.msra.mxu0 0.0
    %122 = vmatprep.subr.mxu0 0.0
    %123 = vmatpush1.msra.mxu0 0.0
    %124 = vmatprep.mubr.f32.mxu0 0.0
    %125 = vmatmul.mubr.f32.gmra.mrb[0].mxu0 %v58
    %v126 = vpop.f32.mrb[0].mxu0
    %v127 = vadd.f32 %v54, %v126
    %v128 = vpop.f32.mrb[0].mxu0
    %129 = vdwg.mxu0
    %v130 = vmul.f32 %v127, 0.01
    %v131 = vmax.f32 %v127, %v130
    %v132 = vld [vmem:[%s3] sm:$0x1]
    %v134 = vlaneseq
    %v135 = vshrl.u32 %v134, 7
    %v136 = vsub.s32 0, %v135
    %v137 = vrot.slane %v132, %v136
    %v139 = vmul.f32 %v131, %v137
    %140 = vadd.xlane.f32.xlu0 %v139
    %v141 = vpop.xlane.xlu0 %140
    %v142 = vxor.u32 %v141, 2147483648
    %v143 = vmul.f32 %v142, 1.442695
    %v144 = vpow.pop %v143
    %v145 = vadd.f32 %v144, 1.0
    %v146 = vrcp.pop %v145
    %v147 = vmul.f32 1.0, %v146
    %v149 = vlaneseq
    %v150 = vand.u32 %v149, 127
    %v151 = vlaneseq
    %v152 = vshrl.u32 %v151, 7
    %v153 = vsub.s32 %v150, %v152
    %v154 = vrot.slane %v147, %v153
    %vm156 = vcmask 57344
    %157 = vst.msk [vmem:[#allocation7] sm:$0x1] %vm156, %v154
    // Predicated region
    $region26: #{tpu_custom_call.1} parent=1 // pred_check
      _
    $region27: #{tpu_custom_call.1} parent=1 // pred_check_branch
      %159 = sbr.rel (0) target = $region29
    $region28: #{tpu_custom_call.1} parent=1 // pred_region
      %s161 = ssub.s32 16, 16
      %162 = vsyncadd [#allocation4], %s161
      %s164 = sshll.u32 [#allocation7], 4
      %s165 = int_to_ptr.vmem [resolvable:$true] %s164
      %167 = dma.vmem_to_hbm [thread:$0]  %s165, 16, %s4, [#allocation4]
    $region29: #{tpu_custom_call.1} parent=1 // pred_fallthru
      _
    // Predicated region
    $region30: #{tpu_custom_call.1} parent=1 // pred_check
      _
    $region31: #{tpu_custom_call.1} parent=1 // pred_check_branch
      %169 = sbr.rel (0) target = $region33
    $region32: #{tpu_custom_call.1} parent=1 // pred_region
      %170 = dma.done [#allocation4], 16
    $region33: #{tpu_custom_call.1} parent=1 // pred_fallthru
      _
    %171 = vsyncpa [#allocation3], 1
    %172 = vsyncpa [#allocation6], 1
    %173 = vsyncpa [#allocation4], 1

</llo_original>
